<compile_context>
chip_gen: v7x
topology: tpu7x:2x2x1
jax: 0.10.0
libtpu: 0.0.40
codegen_flags: <defaults>
</compile_context>

<pallas_src>
import functools

import jax
import jax.numpy as jnp
from jax.experimental import pallas as pl
from jax.experimental.pallas import tpu as pltpu


# ----------------------- fused single-pass kernel ---------------------------

def _fused_kernel(w1t_ref, b1_ref, w2_ref, b2_ref, beta_ref, x_ref, o_ref,
                  *, inv_s):
    # x_ref/o_ref: (1, C, S) full-extent slab for one batch element.
    x = x_ref[0, :, :]                                           # (C, S)
    pooled = jnp.sum(x.astype(jnp.float32), axis=-1,
                     keepdims=True) * inv_s                      # (C, 1) f32

    w1t = w1t_ref[...].astype(jnp.float32)                       # (C, Cr)
    b1 = b1_ref[...].astype(jnp.float32)                         # (1, Cr)
    w2 = w2_ref[...].astype(jnp.float32)                         # (C, Cr)
    b2 = b2_ref[...].astype(jnp.float32)                         # (C, 1)
    beta = beta_ref[...].astype(jnp.float32)                     # (1, 1)

    # conv1 (1x1x1) == dense over C:  y1[j] = sum_c w1[j,c] * pooled[c] + b1[j]
    y1 = jnp.sum(w1t * pooled, axis=0, keepdims=True) + b1       # (1, Cr)
    y1 = y1 * jax.nn.sigmoid(beta * y1)                          # Swish
    # conv2: y2[c] = sum_j w2[c,j] * y1[j] + b2[c]
    y2 = jnp.sum(w2 * y1, axis=-1, keepdims=True) + b2           # (C, 1)
    scale = jax.nn.sigmoid(y2).astype(x.dtype)                   # (C, 1)

    o_ref[0, :, :] = x * scale


# ------------------------- pass 1: spatial pooling --------------------------

def _pool_kernel(x_ref, sum_ref, *, S, ts, masked):
    # x_ref: (1, C, ts) tile; sum_ref: (1, C, 1) f32, resident across s axis.
    @pl.when(pl.program_id(1) == 0)
    def _():
        sum_ref[...] = jnp.zeros_like(sum_ref)

    x = x_ref[...].astype(jnp.float32)
    if masked:
        # Last tile may read out-of-bounds (unspecified values) -> zero them.
        remaining = S - pl.program_id(1) * ts
        lane = jax.lax.broadcasted_iota(jnp.int32, x.shape, 2)
        x = jnp.where(lane < remaining, x, 0.0)
    sum_ref[...] += jnp.sum(x, axis=-1, keepdims=True)


# ------------------------- pass 2: broadcast apply --------------------------

def _apply_kernel(scale_ref, x_ref, o_ref):
    # scale pre-cast to x.dtype in the wrapper; OOB output writes are dropped.
    o_ref[...] = x_ref[...] * scale_ref[...]


# --------------------------------- wrapper ----------------------------------

def _choose_spatial_tile(C, S, bytes_per_elem, budget_bytes):
    """Lane-dense spatial tile sized purely by bytes.

    `bytes_per_elem` accounts for double-buffered DMA copies plus in-kernel
    temporaries per element of the tile; `budget_bytes` is kept under the
    smallest scoped-VMEM default (16 MiB on v5e)."""
    lanes = (budget_bytes // max(1, C * bytes_per_elem)) // 128 * 128
    lanes = max(128, lanes)
    return min(lanes, pl.cdiv(S, 128) * 128)


@functools.partial(jax.jit, static_argnames=("force_two_pass",))
def calayer3d(x, w1, b1, w2, b2, beta, force_two_pass=False):
    """x: (B, C, D, H, W).  w1: (C//r, C), b1: (C//r,), w2: (C, C//r),
    b2: (C,), beta: (1,) — the squeezed 1x1x1 Conv3d weights of CAlayer3D."""
    B, C, D, H, W = x.shape
    S = D * H * W
    Cr = w1.shape[0]
    itemsize = jnp.dtype(x.dtype).itemsize

    x_flat = x.reshape(B, C, S)

    # ---------------- fused single-pass fast path ----------------
    # Footprint per batch step ~ 2*in + 2*out + f32 temp + native temp.
    slab_elems = C * pl.cdiv(S, 128) * 128
    fused_footprint = slab_elems * (5 * itemsize + 8)
    use_fused = (not force_two_pass) and fused_footprint <= 12 * 1024 * 1024

    if use_fused:
        out = pl.pallas_call(
            functools.partial(_fused_kernel, inv_s=1.0 / S),
            out_shape=jax.ShapeDtypeStruct((B, C, S), x.dtype),
            grid_spec=pltpu.PrefetchScalarGridSpec(
                num_scalar_prefetch=0,
                grid=(B,),
                in_specs=[
                    pl.BlockSpec((C, Cr), lambda b: (0, 0)),       # w1.T
                    pl.BlockSpec((1, Cr), lambda b: (0, 0)),       # b1 row
                    pl.BlockSpec((C, Cr), lambda b: (0, 0)),       # w2
                    pl.BlockSpec((C, 1), lambda b: (0, 0)),        # b2 col
                    pl.BlockSpec((1, 1), lambda b: (0, 0)),        # beta
                    pl.BlockSpec((1, C, S), lambda b: (b, 0, 0)),  # x slab
                ],
                out_specs=pl.BlockSpec((1, C, S), lambda b: (b, 0, 0)),
            ),
            compiler_params=pltpu.CompilerParams(
                dimension_semantics=("parallel",)),
            cost_estimate=pl.CostEstimate(
                flops=2 * B * C * S, transcendentals=B * (C + Cr),
                bytes_accessed=2 * B * C * S * itemsize),
        )(w1.T, b1.reshape(1, Cr), w2, b2.reshape(C, 1),
          beta.reshape(1, 1).astype(jnp.float32), x_flat)
        return out.reshape(B, C, D, H, W)

    # ---------------- 2-pass path for large activations ----------------
    bytes_x = B * C * S * itemsize

    # pass 1: per-channel spatial sums (input double-buffer + f32/mask temps)
    ts1 = _choose_spatial_tile(C, S, 2 * itemsize + 12, 12 * 1024 * 1024)
    n_s1 = pl.cdiv(S, ts1)
    sums = pl.pallas_call(
        functools.partial(_pool_kernel, S=S, ts=ts1, masked=(S % ts1 != 0)),
        out_shape=jax.ShapeDtypeStruct((B, C, 1), jnp.float32),
        grid_spec=pltpu.PrefetchScalarGridSpec(
            num_scalar_prefetch=0,
            grid=(B, n_s1),
            in_specs=[pl.BlockSpec((1, C, ts1), lambda b, s: (b, 0, s))],
            out_specs=pl.BlockSpec((1, C, 1), lambda b, s: (b, 0, 0)),
        ),
        compiler_params=pltpu.CompilerParams(
            dimension_semantics=("parallel", "arbitrary")),
        cost_estimate=pl.CostEstimate(
            flops=B * C * S, transcendentals=0,
            bytes_accessed=bytes_x + B * C * 4),
    )(x_flat)

    # tiny FC / Swish / sigmoid on (B, C) in plain XLA (off the hot path)
    pooled = sums[:, :, 0] * jnp.float32(1.0 / S)                    # (B, C)
    y1 = jnp.einsum('bc,oc->bo', pooled, w1.astype(jnp.float32),
                    precision='highest') + b1.astype(jnp.float32)
    y1 = y1 * jax.nn.sigmoid(beta[0].astype(jnp.float32) * y1)       # Swish
    y2 = jnp.einsum('bc,oc->bo', y1, w2.astype(jnp.float32),
                    precision='highest') + b2.astype(jnp.float32)
    scale = jax.nn.sigmoid(y2).astype(x.dtype)[:, :, None]           # (B, C, 1)

    # pass 2: x * scale (2 in-buffers + 2 out-buffers + temp per element)
    ts2 = _choose_spatial_tile(C, S, 5 * itemsize, 12 * 1024 * 1024)
    n_s2 = pl.cdiv(S, ts2)
    out = pl.pallas_call(
        _apply_kernel,
        out_shape=jax.ShapeDtypeStruct((B, C, S), x.dtype),
        grid_spec=pltpu.PrefetchScalarGridSpec(
            num_scalar_prefetch=0,
            grid=(B, n_s2),
            in_specs=[
                pl.BlockSpec((1, C, 1), lambda b, s: (b, 0, 0)),    # scale
                pl.BlockSpec((1, C, ts2), lambda b, s: (b, 0, s)),  # x tile
            ],
            out_specs=pl.BlockSpec((1, C, ts2), lambda b, s: (b, 0, s)),
        ),
        compiler_params=pltpu.CompilerParams(
            dimension_semantics=("parallel", "parallel")),
        cost_estimate=pl.CostEstimate(
            flops=B * C * S, transcendentals=0,
            bytes_accessed=2 * bytes_x + B * C * itemsize),
    )(scale, x_flat)

    return out.reshape(B, C, D, H, W)


# --------------------------------- reference ---------------------------------

def _reference(x, w1, b1, w2, b2, beta):
    y = jnp.mean(x.astype(jnp.float32), axis=(2, 3, 4), keepdims=True)
    y = jnp.einsum('oc,bcxyz->boxyz', w1.astype(jnp.float32), y,
                   precision='highest') + b1[None, :, None, None, None]
    y = y * jax.nn.sigmoid(beta[0] * y)                              # Swish
    y = jnp.einsum('oc,bcxyz->boxyz', w2.astype(jnp.float32), y,
                   precision='highest') + b2[None, :, None, None, None]
    y = jax.nn.sigmoid(y)
    return x * y.astype(x.dtype)


if __name__ == "__main__":
    def make_case(key, B, C, reduction, D, H, W, dtype=jnp.float32):
        Cr = C // reduction
        kx, k1, kb1, k2, kb2 = jax.random.split(key, 5)
        x = jax.random.normal(kx, (B, C, D, H, W), dtype=dtype)
        # Conv3d 1x1x1 kernels squeezed to dense 2-D weights
        w1 = 0.1 * jax.random.normal(k1, (Cr, C), dtype=jnp.float32)
        b1 = 0.1 * jax.random.normal(kb1, (Cr,), dtype=jnp.float32)
        w2 = 0.1 * jax.random.normal(k2, (C, Cr), dtype=jnp.float32)
        b2 = 0.1 * jax.random.normal(kb2, (C,), dtype=jnp.float32)
        beta = jnp.ones((1,), dtype=jnp.float32)   # Swish beta init = 1
        return x, w1, b1, w2, b2, beta

    key = jax.random.PRNGKey(0)
    ka, kb = jax.random.split(key)
    cases = [
        make_case(ka, 2, 8, 4, 4, 8, 8),   # S = 256 (128-aligned tiles)
        make_case(kb, 2, 8, 4, 3, 7, 9),   # S = 189 (ragged / masked tile)
    ]

    ok = True
    for args in cases:
        ref = _reference(*args)
        for force_two_pass in (False, True):   # fused path and tiled 2-pass path
            out = calayer3d(*args, force_two_pass=force_two_pass)
            out = jax.block_until_ready(out)
            ok = ok and (out.shape == args[0].shape)
            ok = ok and bool(jnp.allclose(out, ref, atol=1e-4, rtol=1e-4))
    assert ok, "mismatch vs reference"
    print("KERNEL_OK")
</pallas_src>

<mosaic_0001>
module attributes {stable_mosaic.version = 11 : i64} {
  func.func @_fused_kernel(%arg0: i32, %arg1: memref<8x2xf32, #tpu.memory_space<vmem>>, %arg2: memref<1x2xf32, #tpu.memory_space<vmem>>, %arg3: memref<8x2xf32, #tpu.memory_space<vmem>>, %arg4: memref<8x1xf32, #tpu.memory_space<vmem>>, %arg5: memref<1x1xf32, #tpu.memory_space<vmem>>, %arg6: memref<1x8x256xf32, #tpu.memory_space<vmem>>, %arg7: memref<1x8x256xf32, #tpu.memory_space<vmem>>) attributes {dimension_semantics = [#tpu.dimension_semantics<parallel>], iteration_bounds = array<i64: 2>, scalar_prefetch = 0 : i64, scratch_operands = 0 : i64, tpu.core_type = #tpu.core_type<tc>, window_params = [{pipeline_mode = #tpu.pipeline_mode<synchronous>, transform_indices = @transform_0, window_bounds = array<i64: 8, 2>}, {pipeline_mode = #tpu.pipeline_mode<synchronous>, transform_indices = @transform_1, window_bounds = array<i64: 1, 2>}, {pipeline_mode = #tpu.pipeline_mode<synchronous>, transform_indices = @transform_2, window_bounds = array<i64: 8, 2>}, {pipeline_mode = #tpu.pipeline_mode<synchronous>, transform_indices = @transform_3, window_bounds = array<i64: 8, 1>}, {pipeline_mode = #tpu.pipeline_mode<synchronous>, transform_indices = @transform_4, window_bounds = array<i64: 1, 1>}, {transform_indices = @transform_5, window_bounds = array<i64: 1, 8, 256>}, {transform_indices = @transform_6, window_bounds = array<i64: 1, 8, 256>}]} {
    %c0 = arith.constant 0 : index
    %c0_0 = arith.constant 0 : index
    %c0_1 = arith.constant 0 : index
    %0 = vector.load %arg6[%c0, %c0_0, %c0_1] : memref<1x8x256xf32, #tpu.memory_space<vmem>>, vector<1x8x256xf32>
    %1 = vector.shape_cast %0 : vector<1x8x256xf32> to vector<8x256xf32>
    %cst = arith.constant dense<0.000000e+00> : vector<8xf32>
    %2 = vector.multi_reduction <add>, %1, %cst [1] : vector<8x256xf32> to vector<8xf32>
    %3 = vector.shape_cast %2 : vector<8xf32> to vector<8x1xf32>
    %cst_2 = arith.constant 3.906250e-03 : f32
    %4 = vector.broadcast %cst_2 : f32 to vector<8x1xf32>
    %5 = arith.mulf %3, %4 : vector<8x1xf32>
    %c0_3 = arith.constant 0 : index
    %c0_4 = arith.constant 0 : index
    %6 = vector.load %arg1[%c0_3, %c0_4] : memref<8x2xf32, #tpu.memory_space<vmem>>, vector<8x2xf32>
    %c0_5 = arith.constant 0 : index
    %c0_6 = arith.constant 0 : index
    %7 = vector.load %arg2[%c0_5, %c0_6] : memref<1x2xf32, #tpu.memory_space<vmem>>, vector<1x2xf32>
    %c0_7 = arith.constant 0 : index
    %c0_8 = arith.constant 0 : index
    %8 = vector.load %arg3[%c0_7, %c0_8] : memref<8x2xf32, #tpu.memory_space<vmem>>, vector<8x2xf32>
    %c0_9 = arith.constant 0 : index
    %c0_10 = arith.constant 0 : index
    %9 = vector.load %arg4[%c0_9, %c0_10] : memref<8x1xf32, #tpu.memory_space<vmem>>, vector<8x1xf32>
    %c0_11 = arith.constant 0 : index
    %c0_12 = arith.constant 0 : index
    %10 = vector.load %arg5[%c0_11, %c0_12] : memref<1x1xf32, #tpu.memory_space<vmem>>, vector<1x1xf32>
    %11 = vector.broadcast %5 : vector<8x1xf32> to vector<8x2xf32>
    %12 = arith.mulf %6, %11 : vector<8x2xf32>
    %cst_13 = arith.constant dense<0.000000e+00> : vector<2xf32>
    %13 = vector.multi_reduction <add>, %12, %cst_13 [0] : vector<8x2xf32> to vector<2xf32>
    %14 = vector.shape_cast %13 : vector<2xf32> to vector<1x2xf32>
    %15 = arith.addf %14, %7 : vector<1x2xf32>
    %16 = vector.broadcast %10 : vector<1x1xf32> to vector<1x2xf32>
    %17 = arith.mulf %16, %15 : vector<1x2xf32>
    %18 = arith.negf %17 : vector<1x2xf32>
    %19 = math.exp %18 : vector<1x2xf32>
    %cst_14 = arith.constant 1.000000e+00 : f32
    %20 = vector.broadcast %cst_14 : f32 to vector<1x2xf32>
    %21 = arith.addf %20, %19 : vector<1x2xf32>
    %22 = arith.divf %20, %21 : vector<1x2xf32>
    %23 = arith.mulf %15, %22 : vector<1x2xf32>
    %24 = vector.broadcast %23 : vector<1x2xf32> to vector<8x2xf32>
    %25 = arith.mulf %8, %24 : vector<8x2xf32>
    %cst_15 = arith.constant dense<0.000000e+00> : vector<8xf32>
    %26 = vector.multi_reduction <add>, %25, %cst_15 [1] : vector<8x2xf32> to vector<8xf32>
    %27 = vector.shape_cast %26 : vector<8xf32> to vector<8x1xf32>
    %28 = arith.addf %27, %9 : vector<8x1xf32>
    %29 = arith.negf %28 : vector<8x1xf32>
    %30 = math.exp %29 : vector<8x1xf32>
    %cst_16 = arith.constant 1.000000e+00 : f32
    %31 = vector.broadcast %cst_16 : f32 to vector<8x1xf32>
    %32 = arith.addf %31, %30 : vector<8x1xf32>
    %33 = arith.divf %31, %32 : vector<8x1xf32>
    %34 = vector.broadcast %33 : vector<8x1xf32> to vector<8x256xf32>
    %35 = arith.mulf %1, %34 : vector<8x256xf32>
    %c0_17 = arith.constant 0 : index
    %c0_18 = arith.constant 0 : index
    %c0_19 = arith.constant 0 : index
    %36 = vector.load %arg7[%c0_17, %c0_18, %c0_19] : memref<1x8x256xf32, #tpu.memory_space<vmem>>, vector<1x8x256xf32>
    %37 = vector.shape_cast %36 : vector<1x8x256xf32> to vector<8x256xf32>
    %38 = vector.shape_cast %35 : vector<8x256xf32> to vector<1x8x256xf32>
    tpu.vector_store %arg7[%c0_17, %c0_18, %c0_19], %38 {strides = array<i32>} : memref<1x8x256xf32, #tpu.memory_space<vmem>>, vector<1x8x256xf32>,
    return
  }
  func.func @transform_0(%arg0: i32) -> (i32, i32) {
    %c0_i32 = arith.constant 0 : i32
    %c0_i32_0 = arith.constant 0 : i32
    %c0_i32_1 = arith.constant 0 : i32
    return %c0_i32, %c0_i32_0 : i32, i32
  }
  func.func @transform_1(%arg0: i32) -> (i32, i32) {
    %c0_i32 = arith.constant 0 : i32
    %c0_i32_0 = arith.constant 0 : i32
    %c0_i32_1 = arith.constant 0 : i32
    return %c0_i32, %c0_i32_0 : i32, i32
  }
  func.func @transform_2(%arg0: i32) -> (i32, i32) {
    %c0_i32 = arith.constant 0 : i32
    %c0_i32_0 = arith.constant 0 : i32
    %c0_i32_1 = arith.constant 0 : i32
    return %c0_i32, %c0_i32_0 : i32, i32
  }
  func.func @transform_3(%arg0: i32) -> (i32, i32) {
    %c0_i32 = arith.constant 0 : i32
    %c0_i32_0 = arith.constant 0 : i32
    %c0_i32_1 = arith.constant 0 : i32
    return %c0_i32, %c0_i32_0 : i32, i32
  }
  func.func @transform_4(%arg0: i32) -> (i32, i32) {
    %c0_i32 = arith.constant 0 : i32
    %c0_i32_0 = arith.constant 0 : i32
    %c0_i32_1 = arith.constant 0 : i32
    return %c0_i32, %c0_i32_0 : i32, i32
  }
  func.func @transform_5(%arg0: i32) -> (i32, i32, i32) {
    %c0_i32 = arith.constant 0 : i32
    %c0_i32_0 = arith.constant 0 : i32
    %c0_i32_1 = arith.constant 0 : i32
    return %arg0, %c0_i32, %c0_i32_0 : i32, i32, i32
  }
  func.func @transform_6(%arg0: i32) -> (i32, i32, i32) {
    %c0_i32 = arith.constant 0 : i32
    %c0_i32_0 = arith.constant 0 : i32
    %c0_i32_1 = arith.constant 0 : i32
    return %arg0, %c0_i32, %c0_i32_0 : i32, i32, i32
  }
}

</mosaic_0001>

<llo_original>
// kernel: calayer3d.1
$region0: #{calayer3d.1}
  #allocation0 [shape = 'u32[]', space=smem, size = 0x4, offset = 0x4, fixed_abs, tag = 'smem constant byte address 0x4 - core index']
  #allocation1 [shape = 'u32[144,128]{1,0:T(1,128)}', space=vmem, size = 0x12000, scoped, tag = 'internal scratch']
  #allocation2 [shape = 'f32[1,1]{1,0:T(1,128)S(1)}', space=vmem, size = 0x200, scoped, tag = 'scoped memory for calayer3d.1']
  %s0 = inlined_call_operand.vmem [shape: f32[8,2], index: 0, kind: input, shape index: {}]
  %s1 = inlined_call_operand.vmem [shape: f32[1,2], index: 1, kind: input, shape index: {}]
  %s2 = inlined_call_operand.vmem [shape: f32[8,2], index: 2, kind: input, shape index: {}]
  %s3 = inlined_call_operand.vmem [shape: f32[8,1], index: 3, kind: input, shape index: {}]
  %s4 = inlined_call_operand.<no memory space> [shape: f32[1,1], index: 4, kind: input, shape index: {}]
  %s5 = inlined_call_operand.vmem [shape: f32[2,8,256], index: 5, kind: input, shape index: {}]
  %s6 = inlined_call_operand.vmem [shape: f32[2,8,256], index: 6, kind: output, shape index: {}]
  %s7 = sld [smem:[#allocation0]]
  $region57: #{calayer3d.1} parent=0
    _
  %s9 = ssub.s32 1, %s7
  %s10 = scalar_select 0, %s9, %s7
  %v11 = vstv %s4
  %12 = vst [vmem:[#allocation2] sm:$0x1] %v11
  loop: start=0, step=1, limit=4
  $region2: #{calayer3d.1} parent=0 // loop_pre_header
    _
  $region3: #{calayer3d.1} parent=0 // loop_header
    %s14 = sphi 0, %s18
    %p15 = scmp.ge.s32.totalorder %s14, 4
    %s22 = sphi 0, %s22
    %s24 = sphi 0, %s22
    %s25 = sphi 0, %s24
    %s39 = sphi 0, %s25
    %s43 = sphi 0, %s43
    %s45 = sphi 0, %s43
    %s46 = sphi 0, %s45
    %s60 = sphi 0, %s46
    %s64 = sphi 0, %s64
    %s66 = sphi 0, %s64
    %s67 = sphi 0, %s66
    %s81 = sphi 0, %s67
    %s85 = sphi 0, %s85
    %s87 = sphi 0, %s85
    %s88 = sphi 0, %s87
    %s102 = sphi 0, %s88
    %s106 = sphi 0, %s106
    %s108 = sphi 0, %s106
    %s109 = sphi 0, %s108
    %s123 = sphi 0, %s109
    %s129 = sphi 0, %s131
    %s132 = sphi 0, %s129
    %s133 = sphi 0, %s132
    %s149 = sphi 0, %s133
    %s155 = sphi 0, %s157
    %s158 = sphi 0, %s155
    %s159 = sphi 0, %s158
    %s175 = sphi 0, %s159
  $region4: #{calayer3d.1} parent=0 // loop_header_branch
    %17 = sbr.rel (%p15) target = $region8
  $region5: #{calayer3d.1} parent=0 // loop_body
    %s19 = ssub.s32 %s14, 1
    %s20 = ssub.s32 %s14, 2
    %s21 = sadd.s32 %s14, 1
    %s23 = sadd.s32 %s22, 1
    %p26 = scmp.eq.s32.totalorder %s14, 1
    %p27 = scmp.ne.s32.totalorder %s22, %s24
    %p28 = scmp.eq.s32.totalorder %s14, 0
    %p29 = por %p27, %p28
    %p30 = scmp.ne.s32.totalorder %s22, %s24
    %p31 = scmp.eq.s32.totalorder %s19, 1
    %p32 = por %p30, %p31
    %p33 = scmp.ne.s32.totalorder %s24, %s25
    %p34 = scmp.eq.s32.totalorder %s19, 0
    %p35 = por %p33, %p34
    %p36 = scmp.ne.s32.totalorder %s24, %s25
    %p37 = scmp.eq.s32.totalorder %s20, 1
    %p38 = por %p36, %p37
    %p40 = scmp.ne.s32.totalorder %s25, %s39
    %p41 = scmp.eq.s32.totalorder %s20, 0
    %p42 = por %p40, %p41
    %s44 = sadd.s32 %s43, 1
    %p47 = scmp.eq.s32.totalorder %s14, 1
    %p48 = scmp.ne.s32.totalorder %s43, %s45
    %p49 = scmp.eq.s32.totalorder %s14, 0
    %p50 = por %p48, %p49
    %p51 = scmp.ne.s32.totalorder %s43, %s45
    %p52 = scmp.eq.s32.totalorder %s19, 1
    %p53 = por %p51, %p52
    %p54 = scmp.ne.s32.totalorder %s45, %s46
    %p55 = scmp.eq.s32.totalorder %s19, 0
    %p56 = por %p54, %p55
    %p57 = scmp.ne.s32.totalorder %s45, %s46
    %p58 = scmp.eq.s32.totalorder %s20, 1
    %p59 = por %p57, %p58
    %p61 = scmp.ne.s32.totalorder %s46, %s60
    %p62 = scmp.eq.s32.totalorder %s20, 0
    %p63 = por %p61, %p62
    %s65 = sadd.s32 %s64, 1
    %p68 = scmp.eq.s32.totalorder %s14, 1
    %p69 = scmp.ne.s32.totalorder %s64, %s66
    %p70 = scmp.eq.s32.totalorder %s14, 0
    %p71 = por %p69, %p70
    %p72 = scmp.ne.s32.totalorder %s64, %s66
    %p73 = scmp.eq.s32.totalorder %s19, 1
    %p74 = por %p72, %p73
    %p75 = scmp.ne.s32.totalorder %s66, %s67
    %p76 = scmp.eq.s32.totalorder %s19, 0
    %p77 = por %p75, %p76
    %p78 = scmp.ne.s32.totalorder %s66, %s67
    %p79 = scmp.eq.s32.totalorder %s20, 1
    %p80 = por %p78, %p79
    %p82 = scmp.ne.s32.totalorder %s67, %s81
    %p83 = scmp.eq.s32.totalorder %s20, 0
    %p84 = por %p82, %p83
    %s86 = sadd.s32 %s85, 1
    %p89 = scmp.eq.s32.totalorder %s14, 1
    %p90 = scmp.ne.s32.totalorder %s85, %s87
    %p91 = scmp.eq.s32.totalorder %s14, 0
    %p92 = por %p90, %p91
    %p93 = scmp.ne.s32.totalorder %s85, %s87
    %p94 = scmp.eq.s32.totalorder %s19, 1
    %p95 = por %p93, %p94
    %p96 = scmp.ne.s32.totalorder %s87, %s88
    %p97 = scmp.eq.s32.totalorder %s19, 0
    %p98 = por %p96, %p97
    %p99 = scmp.ne.s32.totalorder %s87, %s88
    %p100 = scmp.eq.s32.totalorder %s20, 1
    %p101 = por %p99, %p100
    %p103 = scmp.ne.s32.totalorder %s88, %s102
    %p104 = scmp.eq.s32.totalorder %s20, 0
    %p105 = por %p103, %p104
    %s107 = sadd.s32 %s106, 1
    %p110 = scmp.eq.s32.totalorder %s14, 1
    %p111 = scmp.ne.s32.totalorder %s106, %s108
    %p112 = scmp.eq.s32.totalorder %s14, 0
    %p113 = por %p111, %p112
    %p114 = scmp.ne.s32.totalorder %s106, %s108
    %p115 = scmp.eq.s32.totalorder %s19, 1
    %p116 = por %p114, %p115
    %p117 = scmp.ne.s32.totalorder %s108, %s109
    %p118 = scmp.eq.s32.totalorder %s19, 0
    %p119 = por %p117, %p118
    %p120 = scmp.ne.s32.totalorder %s108, %s109
    %p121 = scmp.eq.s32.totalorder %s20, 1
    %p122 = por %p120, %p121
    %p124 = scmp.ne.s32.totalorder %s109, %s123
    %p125 = scmp.eq.s32.totalorder %s20, 0
    %p126 = por %p124, %p125
    %s127 = ssub.s32 %s14, %s21
    %p128 = scmp.eq.s32.totalorder %s127, 0
    %s130 = sadd.s32 %s129, 1
    %s131 = scalar_select %p128, %s129, %s130
    %p134 = pneg %p128
    %p135 = scmp.eq.s32.totalorder %s14, 1
    %p136 = por %p134, %p135
    %p137 = scmp.ne.s32.totalorder %s129, %s132
    %p138 = scmp.eq.s32.totalorder %s14, 0
    %p139 = por %p137, %p138
    %p140 = scmp.ne.s32.totalorder %s129, %s132
    %p141 = scmp.eq.s32.totalorder %s19, 1
    %p142 = por %p140, %p141
    %p143 = scmp.ne.s32.totalorder %s132, %s133
    %p144 = scmp.eq.s32.totalorder %s19, 0
    %p145 = por %p143, %p144
    %p146 = scmp.ne.s32.totalorder %s132, %s133
    %p147 = scmp.eq.s32.totalorder %s20, 1
    %p148 = por %p146, %p147
    %p150 = scmp.ne.s32.totalorder %s133, %s149
    %p151 = scmp.eq.s32.totalorder %s20, 0
    %p152 = por %p150, %p151
    %s153 = ssub.s32 %s14, %s21
    %p154 = scmp.eq.s32.totalorder %s153, 0
    %s156 = sadd.s32 %s155, 1
    %s157 = scalar_select %p154, %s155, %s156
    %p160 = pneg %p154
    %p161 = scmp.eq.s32.totalorder %s14, 1
    %p162 = por %p160, %p161
    %p163 = scmp.ne.s32.totalorder %s155, %s158
    %p164 = scmp.eq.s32.totalorder %s14, 0
    %p165 = por %p163, %p164
    %p166 = scmp.ne.s32.totalorder %s155, %s158
    %p167 = scmp.eq.s32.totalorder %s19, 1
    %p168 = por %p166, %p167
    %p169 = scmp.ne.s32.totalorder %s158, %s159
    %p170 = scmp.eq.s32.totalorder %s19, 0
    %p171 = por %p169, %p170
    %p172 = scmp.ne.s32.totalorder %s158, %s159
    %p173 = scmp.eq.s32.totalorder %s20, 1
    %p174 = por %p172, %p173
    %p176 = scmp.ne.s32.totalorder %s159, %s175
    %p177 = scmp.eq.s32.totalorder %s20, 0
    %p178 = por %p176, %p177
    %p179 = scmp.le.s32.totalorder 1, %s14
    %p180 = scmp.lt.s32.totalorder %s14, 3
    %p181 = pnand %p179, %p180
    %p182 = pneg %p181
    // Predicated region
    $region9: #{calayer3d.1} parent=5 // pred_check
      _
    $region10: #{calayer3d.1} parent=5 // pred_check_branch
      %184 = sbr.rel (%p181) target = $region12
    $region11: #{calayer3d.1} parent=5 // pred_region
      %s185 = ssub.s32 %s14, 1
      // Predicated region
      $region13: #{calayer3d.1} parent=11 // pred_check
        %p186 = pneg %p35
      $region14: #{calayer3d.1} parent=11 // pred_check_branch
        %188 = sbr.rel (%p186) target = $region16
      $region15: #{calayer3d.1} parent=11 // pred_region
        _
      $region16: #{calayer3d.1} parent=11 // pred_fallthru
        _
      // Predicated region
      $region17: #{calayer3d.1} parent=11 // pred_check
        %p189 = pneg %p56
      $region18: #{calayer3d.1} parent=11 // pred_check_branch
        %191 = sbr.rel (%p189) target = $region20
      $region19: #{calayer3d.1} parent=11 // pred_region
        _
      $region20: #{calayer3d.1} parent=11 // pred_fallthru
        _
      // Predicated region
      $region21: #{calayer3d.1} parent=11 // pred_check
        %p192 = pneg %p77
      $region22: #{calayer3d.1} parent=11 // pred_check_branch
        %194 = sbr.rel (%p192) target = $region24
      $region23: #{calayer3d.1} parent=11 // pred_region
        _
      $region24: #{calayer3d.1} parent=11 // pred_fallthru
        _
      // Predicated region
      $region25: #{calayer3d.1} parent=11 // pred_check
        %p195 = pneg %p98
      $region26: #{calayer3d.1} parent=11 // pred_check_branch
        %197 = sbr.rel (%p195) target = $region28
      $region27: #{calayer3d.1} parent=11 // pred_region
        _
      $region28: #{calayer3d.1} parent=11 // pred_fallthru
        _
      // Predicated region
      $region29: #{calayer3d.1} parent=11 // pred_check
        %p198 = pneg %p119
      $region30: #{calayer3d.1} parent=11 // pred_check_branch
        %200 = sbr.rel (%p198) target = $region32
      $region31: #{calayer3d.1} parent=11 // pred_region
        _
      $region32: #{calayer3d.1} parent=11 // pred_fallthru
        _
    $region12: #{calayer3d.1} parent=5 // pred_fallthru
      _
    %p201 = scmp.lt.s32.totalorder %s14, 2
    // Predicated region
    $region33: #{calayer3d.1} parent=5 // pred_check
      %p202 = pneg %p201
    $region34: #{calayer3d.1} parent=5 // pred_check_branch
      %204 = sbr.rel (%p202) target = $region36
    $region35: #{calayer3d.1} parent=5 // pred_region
      // Predicated region
      $region37: #{calayer3d.1} parent=35 // pred_check
        %p205 = pneg %p139
      $region38: #{calayer3d.1} parent=35 // pred_check_branch
        %207 = sbr.rel (%p205) target = $region40
      $region39: #{calayer3d.1} parent=35 // pred_region
        %p208 = scmp.lt.s32.totalorder %s14, 1
        %s209 = scalar_select %p208, %s14, 1
        %s210 = smul.addr %s209, 2
        %s211 = smul.addr %s210, 8
        %s212 = scalar_lea.vmem %s5, %s211
      $region40: #{calayer3d.1} parent=35 // pred_fallthru
        _
    $region36: #{calayer3d.1} parent=5 // pred_fallthru
      _
    %p213 = scmp.le.s32.totalorder 1, %s14
    %p214 = scmp.lt.s32.totalorder %s14, 3
    %p215 = pnand %p213, %p214
    %p216 = pneg %p215
    // Predicated region
    $region41: #{calayer3d.1} parent=5 // pred_check
      _
    $region42: #{calayer3d.1} parent=5 // pred_check_branch
      %218 = sbr.rel (%p215) target = $region44
    $region43: #{calayer3d.1} parent=5 // pred_region
      %s219 = ssub.s32 %s14, 1
      %p220 = pneg %p35
      %p221 = pneg %p32
      %p222 = pneg %p56
      %p223 = pneg %p53
      %p224 = pneg %p77
      %p225 = pneg %p74
      %p226 = pneg %p98
      %p227 = pneg %p95
      %p228 = pneg %p119
      %p229 = pneg %p116
      %p230 = scmp.lt.s32.totalorder %s19, 1
      %s231 = scalar_select %p230, %s19, 1
      %s232 = smul.addr %s231, 2
      %s233 = smul.addr %s232, 8
      %s234 = scalar_lea.vmem %s5, %s233
      %p235 = pneg %p145
      %p236 = pneg %p142
      %p237 = pneg %p171
      %p238 = pneg %p168
      %p239 = scmp.lt.s32.totalorder %s19, 1
      %s240 = scalar_select %p239, %s19, 1
      %s241 = smul.addr %s240, 2
      %s242 = smul.addr %s241, 8
      %s243 = scalar_lea.vmem %s6, %s242
      %p244 = scmp.lt.s32.totalorder %s19, 1
      %s245 = scalar_select %p244, %s19, 1
      %s246 = smul.addr %s245, 2
      %s247 = smul.addr %s246, 8
      %s248 = scalar_lea.vmem %s5, %s247
      %p249 = scmp.lt.s32.totalorder %s19, 1
      %s250 = scalar_select %p249, %s19, 1
      %s251 = smul.addr %s250, 2
      %s252 = smul.addr %s251, 8
      %s253 = scalar_lea.vmem %s6, %s252
      %v254 = vld [vmem:[%s248] sm:$0xff]
      %v255 = vld [vmem:[%s248 + $0x8] sm:$0xff]
      %v256 = vadd.f32 %v254, %v255
      %257 = vadd.xlane.f32.xlu0 %v256
      %v258 = vpop.xlane.xlu0 %257
      %v259 = vmul.f32 %v258, 0.00390625
      %v260 = vld [vmem:[%s0] sm:$0xff]
      %v261 = vld [vmem:[%s1] sm:$0x1]
      %v262 = vld [vmem:[%s2] sm:$0xff]
      %v263 = vld [vmem:[%s3] sm:$0xff]
      %v264 = vld [vmem:[#allocation2] sm:$0x1]
      %v265 = vmul.f32 %v260, %v259
      %vm266 = vcmask 15360
      %v267 = vsel %vm266, %v265, 0.0
      %v268 = vrot.slane %v267, 4
      %v269 = vadd.f32 %v267, %v268
      %v270 = vrot.slane %v269, 2
      %v271 = vadd.f32 %v269, %v270
      %v272 = vrot.slane %v271, 1
      %v273 = vadd.f32 %v271, %v272
      %v274 = vadd.f32 %v273, %v261
      %276 = vset.pattern.permute.xlu0 0
      %277 = vperm.xlu0 %276, %v264
      %v278 = vpop.permute.xlu0 %277
      %v280 = vlaneseq
      %v281 = vshrl.u32 %v280, 7
      %v282 = vsub.s32 0, %v281
      %v283 = vrot.slane %v278, %v282
      %v284 = vmul.f32 %v283, %v274
      %v285 = vxor.u32 %v284, 2147483648
      %v286 = vmul.f32 %v285, 1.442695
      %v287 = vpow.pop %v286
      %v288 = vadd.f32 %v287, 1.0
      %v289 = vrcp.pop %v288
      %v290 = vmul.f32 1.0, %v289
      %v291 = vmul.f32 %v274, %v290
      %v292 = vlaneseq
      %v293 = vshrl.u32 %v292, 7
      %v294 = vsub.s32 0, %v293
      %v295 = vrot.slane %v291, %v294
      %v296 = vmul.f32 %v262, %v295
      %v297 = vsel %vm266, %v296, 0.0
      %298 = vadd.xlane.f32.xlu0 %v297
      %v299 = vpop.xlane.xlu0 %298
      %v300 = vadd.f32 %v299, %v263
      %v301 = vxor.u32 %v300, 2147483648
      %v302 = vmul.f32 %v301, 1.442695
      %v303 = vpow.pop %v302
      %v304 = vadd.f32 %v303, 1.0
      %v305 = vrcp.pop %v304
      %v306 = vmul.f32 1.0, %v305
      %308 = vset.pattern.permute.xlu0 0
      %309 = vperm.xlu0 %308, %v306
      %v310 = vpop.permute.xlu0 %309
      %v312 = vmul.f32 %v254, %v310
      %v313 = vmul.f32 %v255, %v310
      %314 = vst [vmem:[%s253] sm:$0xff] %v312
      %315 = vst [vmem:[%s253 + $0x8] sm:$0xff] %v313
      %p316 = scmp.lt.s32.totalorder %s19, 1
      %s317 = scalar_select %p316, %s19, 1
      %s318 = smul.addr %s317, 2
      %s319 = smul.addr %s318, 8
      %s320 = scalar_lea.vmem %s6, %s319
      // Predicated region
      $region45: #{calayer3d.1} parent=43 // pred_check
        %p321 = pneg %p168
      $region46: #{calayer3d.1} parent=43 // pred_check_branch
        %323 = sbr.rel (%p321) target = $region48
      $region47: #{calayer3d.1} parent=43 // pred_region
        _
      $region48: #{calayer3d.1} parent=43 // pred_fallthru
        _
    $region44: #{calayer3d.1} parent=5 // pred_fallthru
      _
    %p324 = scmp.le.s32.totalorder 2, %s14
    // Predicated region
    $region49: #{calayer3d.1} parent=5 // pred_check
      %p325 = pneg %p324
    $region50: #{calayer3d.1} parent=5 // pred_check_branch
      %327 = sbr.rel (%p325) target = $region52
    $region51: #{calayer3d.1} parent=5 // pred_region
      %s328 = ssub.s32 %s14, 2
      // Predicated region
      $region53: #{calayer3d.1} parent=51 // pred_check
        %p329 = pneg %p174
      $region54: #{calayer3d.1} parent=51 // pred_check_branch
        %331 = sbr.rel (%p329) target = $region56
      $region55: #{calayer3d.1} parent=51 // pred_region
        %p332 = scmp.lt.s32.totalorder %s20, 1
        %s333 = scalar_select %p332, %s20, 1
        %s334 = smul.addr %s333, 2
        %s335 = smul.addr %s334, 8
        %s336 = scalar_lea.vmem %s6, %s335
      $region56: #{calayer3d.1} parent=51 // pred_fallthru
        _
    $region52: #{calayer3d.1} parent=5 // pred_fallthru
      _
  $region6: #{calayer3d.1} parent=0 // loop_footer
    %s18 = sadd.s32 1, %s14
  $region7: #{calayer3d.1} parent=0 // loop_footer_branch
    %13 = sbr.rel target = $region3
  $region8: #{calayer3d.1} parent=0 // loop_exit
    _

</llo_original>
